<compile_context>
chip_gen: v6e
topology: v6e:2x2x1
jax: 0.10.0
libtpu: 0.0.40
codegen_flags: <defaults>
</compile_context>

<pallas_src>
import functools

import jax
import jax.numpy as jnp
from jax.experimental import pallas as pl
from jax.experimental.pallas import tpu as pltpu


_HW_TILE_CANDIDATES = (8192, 4096, 2048, 1024, 512, 256, 128)
_VMEM_BUDGET = 12 * 1024 * 1024    # per-step working set, safe on v5e default scoped VMEM
_FUSED_BUDGET = 10 * 1024 * 1024   # budget for the fused (x-resident) single-pass path


def _sublane_pack(itemsize):
    # Sub-32-bit dtypes pack along sublanes: keep c_tile a full packed vreg.
    return {4: 8, 2: 16, 1: 32}.get(itemsize, 8)


def _pick_c_tile(C, itemsize):
    pack = _sublane_pack(itemsize)
    divs = [d for d in range(pack, min(C, 256) + 1, pack) if C % d == 0]
    if not divs:
        return C                       # full channel dim is always a legal block dim
    multi = [d for d in divs if C // d >= 2]   # >=2 channel blocks -> v7x megacore
    return max(multi) if multi else max(divs)


def _pick_hw_tile(HW, c_tile, itemsize):
    if HW <= 128:
        return HW                      # full spatial dim, single lane-tile
    # 2x double-buffered in/out blocks + ~2 f32 temporaries per element.
    per_elem = 4 * itemsize + 2 * 4
    cap = (_VMEM_BUDGET // (per_elem * c_tile)) // 128 * 128
    cap = max(cap, 128)
    for cand in _HW_TILE_CANDIDATES:
        if cand <= HW and cand <= cap:
            return cand
    return 128


# --------------------------------------------------------------------------
# Fused single-pass kernel: x block (N, c_tile, HW) is resident in VMEM.
# --------------------------------------------------------------------------
def _fused_kernel(x_ref, gamma_ref, beta_ref, o_ref, *, inv_count, eps):
    x = x_ref[...].astype(jnp.float32)                       # (N, c_tile, HW)
    s = jnp.sum(jnp.sum(x, axis=2, keepdims=True), axis=0, keepdims=True)
    mean = s * inv_count                                     # (1, c_tile, 1)
    xc = x - mean
    ss = jnp.sum(jnp.sum(xc * xc, axis=2, keepdims=True), axis=0, keepdims=True)
    var = ss * inv_count                                     # centered (accurate) variance
    scale = gamma_ref[...][None] * jax.lax.rsqrt(var + eps)  # (1, c_tile, 1)
    shift = beta_ref[...][None]
    o_ref[...] = (xc * scale + shift).astype(o_ref.dtype)


# --------------------------------------------------------------------------
# Two-pass tiled path: pass 1 stats (narrow accumulators), pass 2 apply.
# --------------------------------------------------------------------------
def _stats_kernel(x_ref, gamma_ref, beta_ref, scale_ref, shift_ref,
                  sum_acc, sq_acc, *, inv_count, eps, hw, hw_tile):
    """Accumulate per-channel sum / sum-of-squares; fold affine at finalize."""
    n = pl.program_id(1)
    m = pl.program_id(2)

    @pl.when(jnp.logical_and(n == 0, m == 0))
    def _init():
        sum_acc[...] = jnp.zeros_like(sum_acc)
        sq_acc[...] = jnp.zeros_like(sq_acc)

    x = x_ref[0].astype(jnp.float32)                          # (c_tile, hw_tile)

    if hw % hw_tile != 0:
        # Mask the ragged tail tile: padded lanes must not pollute the stats.
        lane = jax.lax.broadcasted_iota(jnp.int32, x.shape, 1)
        valid = (m * hw_tile + lane) < hw
        x = jnp.where(valid, x, 0.0)

    # Lane-reduce first, then accumulate into narrow (c_tile, 1) scratch:
    # no full-width read-modify-write, so the pass stays HBM-bound.
    sum_acc[...] += jnp.sum(x, axis=-1, keepdims=True)
    sq_acc[...] += jnp.sum(x * x, axis=-1, keepdims=True)

    @pl.when(jnp.logical_and(n == pl.num_programs(1) - 1,
                             m == pl.num_programs(2) - 1))
    def _finalize():
        mean = sum_acc[...] * inv_count
        var = jnp.maximum(sq_acc[...] * inv_count - mean * mean, 0.0)
        scale = gamma_ref[...] * jax.lax.rsqrt(var + eps)
        shift = beta_ref[...] - mean * scale
        scale_ref[...] = scale
        shift_ref[...] = shift


def _apply_kernel(x_ref, scale_ref, shift_ref, o_ref):
    """y = x * scale + shift (affine already folded into scale/shift)."""
    x = x_ref[0].astype(jnp.float32)                          # (c_tile, hw_tile)
    o_ref[0] = (x * scale_ref[...] + shift_ref[...]).astype(o_ref.dtype)


# --------------------------------------------------------------------------
# Wrapper
# --------------------------------------------------------------------------
def batch_norm_2d_pallas(img, gamma, beta, eps=1e-5, force_two_pass=False):
    """Training-mode BatchNorm2d. img: (N, C, H, W); gamma, beta: (C,)."""
    N, C, H, W = img.shape
    HW = H * W
    itemsize = jnp.dtype(img.dtype).itemsize

    x3d = img.reshape(N, C, HW)                    # free view, no data movement
    gamma2d = gamma.astype(jnp.float32).reshape(C, 1)
    beta2d = beta.astype(jnp.float32).reshape(C, 1)

    c_tile = _pick_c_tile(C, itemsize)
    inv_count = 1.0 / float(N * HW)

    # ---- fused single-pass path: one HBM read + one write of x -------------
    slab = N * c_tile * HW
    fused_bytes = 4 * slab * itemsize + 3 * slab * 4
    if (not force_two_pass) and fused_bytes <= _FUSED_BUDGET:
        y3d = pl.pallas_call(
            functools.partial(_fused_kernel, inv_count=inv_count, eps=float(eps)),
            out_shape=jax.ShapeDtypeStruct((N, C, HW), img.dtype),
            grid=(C // c_tile,),
            in_specs=[pl.BlockSpec((N, c_tile, HW), lambda c: (0, c, 0)),
                      pl.BlockSpec((c_tile, 1), lambda c: (c, 0)),
                      pl.BlockSpec((c_tile, 1), lambda c: (c, 0))],
            out_specs=pl.BlockSpec((N, c_tile, HW), lambda c: (0, c, 0)),
            compiler_params=pltpu.CompilerParams(
                dimension_semantics=("parallel",)),
        )(x3d, gamma2d, beta2d)
        return y3d.reshape(N, C, H, W)

    # ---- two-pass tiled path ------------------------------------------------
    hw_tile = _pick_hw_tile(HW, c_tile, itemsize)
    grid = (C // c_tile, N, pl.cdiv(HW, hw_tile))  # (channel, batch, spatial)

    x_spec = pl.BlockSpec((1, c_tile, hw_tile), lambda c, n, m: (n, c, m))
    vec_spec = pl.BlockSpec((c_tile, 1), lambda c, n, m: (c, 0))

    stats_kernel = functools.partial(
        _stats_kernel, inv_count=inv_count, eps=float(eps), hw=HW, hw_tile=hw_tile)
    scale, shift = pl.pallas_call(
        stats_kernel,
        out_shape=(jax.ShapeDtypeStruct((C, 1), jnp.float32),
                   jax.ShapeDtypeStruct((C, 1), jnp.float32)),
        grid=grid,
        in_specs=[x_spec, vec_spec, vec_spec],
        out_specs=(vec_spec, vec_spec),
        scratch_shapes=[pltpu.VMEM((c_tile, 1), jnp.float32),
                        pltpu.VMEM((c_tile, 1), jnp.float32)],
        compiler_params=pltpu.CompilerParams(
            dimension_semantics=("parallel", "arbitrary", "arbitrary")),
    )(x3d, gamma2d, beta2d)

    y3d = pl.pallas_call(
        _apply_kernel,
        out_shape=jax.ShapeDtypeStruct((N, C, HW), img.dtype),
        grid=grid,
        in_specs=[x_spec, vec_spec, vec_spec],
        out_specs=x_spec,
        compiler_params=pltpu.CompilerParams(
            dimension_semantics=("parallel", "parallel", "parallel")),
    )(x3d, scale, shift)

    return y3d.reshape(N, C, H, W)


def unconditional_batch_norm_2d(inputs, gamma, beta, eps=1e-5):
    """Mirrors UnconditionalBatchNorm2d.forward: (img, label) -> (bn(img), label)."""
    img, label = inputs
    return (batch_norm_2d_pallas(img, gamma, beta, eps=eps), label)


if __name__ == "__main__":
    key = jax.random.PRNGKey(0)
    k_img, k_lbl, k_g, k_b, k_img2 = jax.random.split(key, 5)

    def ref_bn(x, g, b, eps=1e-5):
        c = x.shape[1]
        mean = jnp.mean(x, axis=(0, 2, 3), keepdims=True)
        var = jnp.mean((x - mean) ** 2, axis=(0, 2, 3), keepdims=True)
        return (x - mean) / jnp.sqrt(var + eps) * g.reshape(1, c, 1, 1) \
               + b.reshape(1, c, 1, 1)

    # ---- demo shape (hits the fused single-pass path) ----------------------
    N, C, H, W = 2, 4, 16, 16
    img = jax.random.normal(k_img, (N, C, H, W), dtype=jnp.float32)
    label = jax.random.randint(k_lbl, (N,), 0, 10, dtype=jnp.int32)

    # nn.BatchNorm2d default init: gamma = 1, beta = 0.
    gamma = jnp.ones((C,), dtype=jnp.float32)
    beta = jnp.zeros((C,), dtype=jnp.float32)

    out_img, out_label = unconditional_batch_norm_2d((img, label), gamma, beta)
    jax.block_until_ready(out_img)
    jax.block_until_ready(out_label)
    assert jnp.allclose(out_img, ref_bn(img, gamma, beta), atol=1e-4, rtol=1e-4)
    assert jnp.array_equal(out_label, label)

    # Non-trivial affine params (folded scale/shift path).
    gamma2 = jax.random.normal(k_g, (C,), dtype=jnp.float32) * 0.5 + 1.0
    beta2 = jax.random.normal(k_b, (C,), dtype=jnp.float32)
    out2, _ = unconditional_batch_norm_2d((img, label), gamma2, beta2)
    jax.block_until_ready(out2)
    assert jnp.allclose(out2, ref_bn(img, gamma2, beta2), atol=1e-4, rtol=1e-4)

    # ---- exercise the tiled two-pass path with a ragged H*W (14*14=196) ----
    N2, C2, H2, W2 = 2, 8, 14, 14
    img_b = jax.random.normal(k_img2, (N2, C2, H2, W2), dtype=jnp.float32)
    gamma_b = jnp.ones((C2,), dtype=jnp.float32)
    beta_b = jnp.zeros((C2,), dtype=jnp.float32)
    out_b = batch_norm_2d_pallas(img_b, gamma_b, beta_b, force_two_pass=True)
    jax.block_until_ready(out_b)
    assert jnp.allclose(out_b, ref_bn(img_b, gamma_b, beta_b), atol=1e-4, rtol=1e-4)

    print("KERNEL_OK")
</pallas_src>

<mosaic_0001>
module attributes {stable_mosaic.version = 11 : i64} {
  func.func @_fused_kernel(%arg0: i32, %arg1: memref<2x4x256xf32, #tpu.memory_space<vmem>>, %arg2: memref<4x1xf32, #tpu.memory_space<vmem>>, %arg3: memref<4x1xf32, #tpu.memory_space<vmem>>, %arg4: memref<2x4x256xf32, #tpu.memory_space<vmem>>) attributes {dimension_semantics = [#tpu.dimension_semantics<parallel>], iteration_bounds = array<i64: 1>, scalar_prefetch = 0 : i64, scratch_operands = 0 : i64, tpu.core_type = #tpu.core_type<tc>, window_params = [{transform_indices = @transform_0, window_bounds = array<i64: 2, 4, 256>}, {transform_indices = @transform_1, window_bounds = array<i64: 4, 1>}, {transform_indices = @transform_2, window_bounds = array<i64: 4, 1>}, {transform_indices = @transform_3, window_bounds = array<i64: 2, 4, 256>}]} {
    %c0 = arith.constant 0 : index
    %c0_0 = arith.constant 0 : index
    %c0_1 = arith.constant 0 : index
    %0 = vector.load %arg1[%c0, %c0_0, %c0_1] : memref<2x4x256xf32, #tpu.memory_space<vmem>>, vector<2x4x256xf32>
    %cst = arith.constant dense<0.000000e+00> : vector<2x4xf32>
    %1 = vector.multi_reduction <add>, %0, %cst [2] : vector<2x4x256xf32> to vector<2x4xf32>
    %2 = vector.shape_cast %1 : vector<2x4xf32> to vector<2x4x1xf32>
    %cst_2 = arith.constant dense<0.000000e+00> : vector<4x1xf32>
    %3 = vector.multi_reduction <add>, %2, %cst_2 [0] : vector<2x4x1xf32> to vector<4x1xf32>
    %4 = vector.shape_cast %3 : vector<4x1xf32> to vector<1x4x1xf32>
    %cst_3 = arith.constant 0.001953125 : f32
    %5 = vector.broadcast %cst_3 : f32 to vector<1x4x1xf32>
    %6 = arith.mulf %4, %5 : vector<1x4x1xf32>
    %7 = vector.broadcast %6 : vector<1x4x1xf32> to vector<2x4x256xf32>
    %8 = arith.subf %0, %7 : vector<2x4x256xf32>
    %9 = arith.mulf %8, %8 : vector<2x4x256xf32>
    %cst_4 = arith.constant dense<0.000000e+00> : vector<2x4xf32>
    %10 = vector.multi_reduction <add>, %9, %cst_4 [2] : vector<2x4x256xf32> to vector<2x4xf32>
    %11 = vector.shape_cast %10 : vector<2x4xf32> to vector<2x4x1xf32>
    %cst_5 = arith.constant dense<0.000000e+00> : vector<4x1xf32>
    %12 = vector.multi_reduction <add>, %11, %cst_5 [0] : vector<2x4x1xf32> to vector<4x1xf32>
    %13 = vector.shape_cast %12 : vector<4x1xf32> to vector<1x4x1xf32>
    %cst_6 = arith.constant 0.001953125 : f32
    %14 = vector.broadcast %cst_6 : f32 to vector<1x4x1xf32>
    %15 = arith.mulf %13, %14 : vector<1x4x1xf32>
    %c0_7 = arith.constant 0 : index
    %c0_8 = arith.constant 0 : index
    %16 = vector.load %arg2[%c0_7, %c0_8] : memref<4x1xf32, #tpu.memory_space<vmem>>, vector<4x1xf32>
    %17 = vector.shape_cast %16 : vector<4x1xf32> to vector<1x4x1xf32>
    %cst_9 = arith.constant 9.99999974E-6 : f32
    %18 = vector.broadcast %cst_9 : f32 to vector<1x4x1xf32>
    %19 = arith.addf %15, %18 : vector<1x4x1xf32>
    %20 = math.rsqrt %19 : vector<1x4x1xf32>
    %21 = arith.mulf %17, %20 : vector<1x4x1xf32>
    %c0_10 = arith.constant 0 : index
    %c0_11 = arith.constant 0 : index
    %22 = vector.load %arg3[%c0_10, %c0_11] : memref<4x1xf32, #tpu.memory_space<vmem>>, vector<4x1xf32>
    %23 = vector.shape_cast %22 : vector<4x1xf32> to vector<1x4x1xf32>
    %24 = vector.broadcast %21 : vector<1x4x1xf32> to vector<2x4x256xf32>
    %25 = arith.mulf %8, %24 : vector<2x4x256xf32>
    %26 = vector.broadcast %23 : vector<1x4x1xf32> to vector<2x4x256xf32>
    %27 = arith.addf %25, %26 : vector<2x4x256xf32>
    %c0_12 = arith.constant 0 : index
    %c0_13 = arith.constant 0 : index
    %c0_14 = arith.constant 0 : index
    %28 = vector.load %arg4[%c0_12, %c0_13, %c0_14] : memref<2x4x256xf32, #tpu.memory_space<vmem>>, vector<2x4x256xf32>
    tpu.vector_store %arg4[%c0_12, %c0_13, %c0_14], %27 {strides = array<i32>} : memref<2x4x256xf32, #tpu.memory_space<vmem>>, vector<2x4x256xf32>,
    return
  }
  func.func @transform_0(%arg0: i32) -> (i32, i32, i32) {
    %c0_i32 = arith.constant 0 : i32
    %c0_i32_0 = arith.constant 0 : i32
    %c0_i32_1 = arith.constant 0 : i32
    return %c0_i32, %arg0, %c0_i32_0 : i32, i32, i32
  }
  func.func @transform_1(%arg0: i32) -> (i32, i32) {
    %c0_i32 = arith.constant 0 : i32
    %c0_i32_0 = arith.constant 0 : i32
    return %arg0, %c0_i32 : i32, i32
  }
  func.func @transform_2(%arg0: i32) -> (i32, i32) {
    %c0_i32 = arith.constant 0 : i32
    %c0_i32_0 = arith.constant 0 : i32
    return %arg0, %c0_i32 : i32, i32
  }
  func.func @transform_3(%arg0: i32) -> (i32, i32, i32) {
    %c0_i32 = arith.constant 0 : i32
    %c0_i32_0 = arith.constant 0 : i32
    %c0_i32_1 = arith.constant 0 : i32
    return %c0_i32, %arg0, %c0_i32_0 : i32, i32, i32
  }
}

</mosaic_0001>

<llo_original>
// kernel: tpu_custom_call.1
$region0: #{tpu_custom_call.1}
  #allocation0 [shape = 'u32[]', space=smem, size = 0x4, offset = 0x4, fixed_abs, tag = 'smem constant byte address 0x4 - core index']
  #allocation1 [shape = 'u32[144,128]{1,0:T(1,128)}', space=vmem, size = 0x12000, scoped, tag = 'internal scratch']
  %s0 = inlined_call_operand.hbm [shape: f32[2,4,256], index: 0, kind: input, shape index: {}]
  %s1 = inlined_call_operand.vmem [shape: f32[4,1], index: 1, kind: input, shape index: {}]
  %s2 = inlined_call_operand.vmem [shape: f32[4,1], index: 2, kind: input, shape index: {}]
  %s3 = inlined_call_operand.hbm [shape: f32[2,4,256], index: 3, kind: output, shape index: {}]
  %s4 = sld [smem:[#allocation0]]
  $region26: #{tpu_custom_call.1} parent=0
    _
  %s6 = ssub.s32 1, %s4
  %s7 = scalar_select 0, %s6, %s4
  $region1: #{tpu_custom_call.1} parent=0
    #allocation2 [shape = 'u8[8192]{0}', space=vmem, size = 0x2000, scoped, tag = 'input window, operand 0, single buffered']
    #allocation3 [shape = 's32[1]{0}', space=sflag, size = 0x4, scoped, tag = 'scoped memory for tpu_custom_call.1']
    #allocation4 [shape = 's32[1]{0}', space=sflag, size = 0x4, scoped, tag = 'scoped memory for tpu_custom_call.1']
    #allocation5 [shape = 'u8[8192]{0}', space=vmem, size = 0x2000, scoped, tag = 'output window, operand 0, single buffered']
    %8 = vsyncpa [#allocation3], 0
    %9 = vsyncpa [#allocation4], 0
    // Predicated region
    $region2: #{tpu_custom_call.1} parent=1 // pred_check
      _
    $region3: #{tpu_custom_call.1} parent=1 // pred_check_branch
      %11 = sbr.rel (0) target = $region5
    $region4: #{tpu_custom_call.1} parent=1 // pred_region
      %s13 = ssub.s32 256, 256
      %14 = vsyncadd [#allocation3], %s13
      %s15 = sshll.u32 [#allocation2], 4
      %s16 = int_to_ptr.vmem [resolvable:$true] %s15
      %21 = dma.hbm_to_vmem [thread:$0]  %s0, 256, %s16, [#allocation3], 128, 128, 8
    $region5: #{tpu_custom_call.1} parent=1 // pred_fallthru
      _
    // Predicated region
    $region6: #{tpu_custom_call.1} parent=1 // pred_check
      _
    $region7: #{tpu_custom_call.1} parent=1 // pred_check_branch
      %23 = sbr.rel (0) target = $region9
    $region8: #{tpu_custom_call.1} parent=1 // pred_region
      _
    $region9: #{tpu_custom_call.1} parent=1 // pred_fallthru
      _
    // Predicated region
    $region10: #{tpu_custom_call.1} parent=1 // pred_check
      _
    $region11: #{tpu_custom_call.1} parent=1 // pred_check_branch
      %25 = sbr.rel (0) target = $region13
    $region12: #{tpu_custom_call.1} parent=1 // pred_region
      _
    $region13: #{tpu_custom_call.1} parent=1 // pred_fallthru
      _
    // Predicated region
    $region14: #{tpu_custom_call.1} parent=1 // pred_check
      _
    $region15: #{tpu_custom_call.1} parent=1 // pred_check_branch
      %27 = sbr.rel (0) target = $region17
    $region16: #{tpu_custom_call.1} parent=1 // pred_region
      %28 = dma.done [#allocation3], 256
    $region17: #{tpu_custom_call.1} parent=1 // pred_fallthru
      _
    %v29 = vld [vmem:[#allocation2] sm:$0xff]
    %v30 = vld [vmem:[#allocation2 + $0x8] sm:$0xff]
    %v33 = vcombine.high %v29, %v29
    %v34 = vcombine.high %v30, %v30
    %vm37 = vcmask 1043456
    %v38 = vsel %vm37, %v29, 0.0
    %v39 = vsel %vm37, %v33, 0.0
    %v40 = vadd.f32 %v38, %v39
    %41 = vadd.xlane.f32.xlu0 %v40
    %v42 = vpop.xlane.xlu0 %41
    %v43 = vsel %vm37, %v30, 0.0
    %v44 = vsel %vm37, %v34, 0.0
    %v45 = vadd.f32 %v43, %v44
    %46 = vadd.xlane.f32.xlu0 %v45
    %v47 = vpop.xlane.xlu0 %46
    %v48 = vsel %vm37, %v42, 0.0
    %v49 = vsel %vm37, %v47, 0.0
    %v50 = vadd.f32 %v48, %v49
    %v51 = vmul.f32 %v50, 0.001953125
    %v54 = vunpack.c.l.s4 839922192
    %v55 = vunpack.c.0.s8 %v54
    %v56 = vlaneseq
    %v57 = vshrl.u32 %v56, 7
    %v58 = vsub.s32 %v55, %v57
    %v59 = vrot.slane %v51, %v58
    %v61 = vsub.f32 %v29, %v59
    %v62 = vsub.f32 %v30, %v59
    %v63 = vmul.f32 %v61, %v61
    %v64 = vmul.f32 %v62, %v62
    %v67 = vcombine.high %v63, %v63
    %v68 = vcombine.high %v64, %v64
    %v71 = vsel %vm37, %v63, 0.0
    %v72 = vsel %vm37, %v67, 0.0
    %v73 = vadd.f32 %v71, %v72
    %74 = vadd.xlane.f32.xlu0 %v73
    %v75 = vpop.xlane.xlu0 %74
    %v76 = vsel %vm37, %v64, 0.0
    %v77 = vsel %vm37, %v68, 0.0
    %v78 = vadd.f32 %v76, %v77
    %79 = vadd.xlane.f32.xlu0 %v78
    %v80 = vpop.xlane.xlu0 %79
    %v81 = vsel %vm37, %v75, 0.0
    %v82 = vsel %vm37, %v80, 0.0
    %v83 = vadd.f32 %v81, %v82
    %v84 = vmul.f32 %v83, 0.001953125
    %v85 = vld [vmem:[%s1] sm:$0xf]
    %v86 = vadd.f32 %v84, 1e-05
    %v87 = vrsqrt.pop %v86
    %v88 = vmul.f32 %v85, %v87
    %v89 = vld [vmem:[%s2] sm:$0xf]
    %91 = vset.pattern.permute.xlu0 0
    %92 = vperm.xlu0 %91, %v88
    %v93 = vpop.permute.xlu0 %92
    %v95 = vunpack.c.l.s4 839922192
    %v96 = vunpack.c.0.s8 %v95
    %v97 = vlaneseq
    %v98 = vshrl.u32 %v97, 7
    %v99 = vsub.s32 %v96, %v98
    %v100 = vrot.slane %v93, %v99
    %v102 = vmul.f32 %v61, %v100
    %v103 = vmul.f32 %v62, %v100
    %105 = vset.pattern.permute.xlu0 0
    %106 = vperm.xlu0 %105, %v89
    %v107 = vpop.permute.xlu0 %106
    %v109 = vunpack.c.l.s4 839922192
    %v110 = vunpack.c.0.s8 %v109
    %v111 = vlaneseq
    %v112 = vshrl.u32 %v111, 7
    %v113 = vsub.s32 %v110, %v112
    %v114 = vrot.slane %v107, %v113
    %v116 = vadd.f32 %v102, %v114
    %v117 = vadd.f32 %v103, %v114
    %118 = vst [vmem:[#allocation5] sm:$0xff] %v116
    %119 = vst [vmem:[#allocation5 + $0x8] sm:$0xff] %v117
    // Predicated region
    $region18: #{tpu_custom_call.1} parent=1 // pred_check
      _
    $region19: #{tpu_custom_call.1} parent=1 // pred_check_branch
      %121 = sbr.rel (0) target = $region21
    $region20: #{tpu_custom_call.1} parent=1 // pred_region
      %s123 = ssub.s32 256, 256
      %124 = vsyncadd [#allocation4], %s123
      %s125 = sshll.u32 [#allocation5], 4
      %s126 = int_to_ptr.vmem [resolvable:$true] %s125
      %131 = dma.vmem_to_hbm [thread:$0]  %s126, 256, %s3, [#allocation4], 128, 128, 8
    $region21: #{tpu_custom_call.1} parent=1 // pred_fallthru
      _
    // Predicated region
    $region22: #{tpu_custom_call.1} parent=1 // pred_check
      _
    $region23: #{tpu_custom_call.1} parent=1 // pred_check_branch
      %133 = sbr.rel (0) target = $region25
    $region24: #{tpu_custom_call.1} parent=1 // pred_region
      %134 = dma.done [#allocation4], 256
    $region25: #{tpu_custom_call.1} parent=1 // pred_fallthru
      _
    %135 = vsyncpa [#allocation3], 1
    %136 = vsyncpa [#allocation4], 1

</llo_original>
